<compile_context>
chip_gen: v7x
topology: tpu7x:2x2x1
jax: 0.10.0
libtpu: 0.0.40
codegen_flags: <defaults>
</compile_context>

<pallas_src>
import math

import jax
import jax.numpy as jnp
from jax.experimental import pallas as pl
from jax.experimental.pallas import tpu as pltpu

NEG_SLOPE = 0.2
MASK_VAL = -1e30


def _project_kernel(x_ref, waug_ref, feat_ref, scores_ref):
    # x_ref      : (Tn, Din)         node-feature tile
    # waug_ref   : (Din, H*F + 2H)   fused [W_feat | W_el | W_er]
    # feat_ref   : (Tn, H*F) bf16    projected features, lane-dense
    # scores_ref : (Tn, 2H)  f32     [el | er] attention scores per node
    hf = feat_ref.shape[1]
    y = jnp.dot(x_ref[...], waug_ref[...], preferred_element_type=jnp.float32)
    feat_ref[...] = y[:, :hf].astype(feat_ref.dtype)
    scores_ref[...] = y[:, hf:]


def _attention_kernel(feat_ref, el_ref, er_ref, adj_ref, out_ref,
                      m_ref, l_ref, acc_ref):
    # feat_ref : (Ts, H*F) bf16   source features (all heads, lane-dense)
    # el_ref   : (H, Ts)   f32    source attention scores (lane-dense rows)
    # er_ref   : (Td, H)   f32    destination attention scores (columns)
    # adj_ref  : (Td, Ts)  int8   adjacency tile (dst, src)
    # out_ref  : (Td, H*F) f32    lane-dense output tile
    # m_ref/l_ref : (Td, H) f32   online-softmax running max / denominator
    # acc_ref  : (Td, H*F) f32    lane-dense accumulator
    s = pl.program_id(1)
    n_heads = er_ref.shape[1]
    out_feats = acc_ref.shape[1] // n_heads

    @pl.when(s == 0)
    def _init():
        m_ref[...] = jnp.full_like(m_ref, MASK_VAL)
        l_ref[...] = jnp.zeros_like(l_ref)
        acc_ref[...] = jnp.zeros_like(acc_ref)

    # Additive mask bias: computed once per (dst, src) tile, shared by every
    # head (hoisted out of the head loop).
    bias = jnp.where(adj_ref[...] > 0, jnp.float32(0.0), jnp.float32(MASK_VAL))

    # Static loop over heads: H is small (<= 8 typically).  For large H a
    # lax.fori_loop would bound the live range of the (Td, Ts) temporaries.
    for h in range(n_heads):
        el_h = el_ref[h:h + 1, :]                          # (1, Ts)
        er_h = er_ref[:, h:h + 1]                          # (Td, 1)
        # e[d, s] = leaky_relu(el[s] + er[d]) + mask_bias   (fn.u_add_v)
        e = er_h + el_h                                    # (Td, Ts)
        e = jnp.maximum(e, NEG_SLOPE * e) + bias

        m_prev = m_ref[:, h:h + 1]                         # (Td, 1)
        m_new = jnp.maximum(m_prev, jnp.max(e, axis=-1, keepdims=True))
        alpha = jnp.exp(m_prev - m_new)
        # exp(MASK_VAL - m_new) underflows to 0 once a dst row has seen a real
        # edge; rows that are still all-masked accumulate a bogus constant
        # that is erased (alpha -> 0) at the first real edge.  Self-loops
        # guarantee every row eventually has one (hard precondition).
        # TODO(synk): on v6e/v7x cast (e - m_new) to bf16 before the exp for
        # ~2x EUP throughput (keep m/l in f32); skip on v5e (no bf16 EUP).
        p = jnp.exp(e - m_new)                             # (Td, Ts) f32

        l_ref[:, h:h + 1] = alpha * l_ref[:, h:h + 1] + jnp.sum(
            p, axis=-1, keepdims=True)
        lo, hi = h * out_feats, (h + 1) * out_feats
        acc_ref[:, lo:hi] = alpha * acc_ref[:, lo:hi] + jnp.dot(
            p.astype(jnp.bfloat16), feat_ref[:, lo:hi],
            preferred_element_type=jnp.float32)            # (Td, F), MXU bf16
        m_ref[:, h:h + 1] = m_new

    @pl.when(s == pl.num_programs(1) - 1)
    def _finalize():
        # Exact reciprocal: runs once per dst tile, so not on the hot path.
        inv = pl.reciprocal(l_ref[...])                    # (Td, H)
        acc = acc_ref[...]
        normed = jnp.concatenate(
            [acc[:, h * out_feats:(h + 1) * out_feats] * inv[:, h:h + 1]
             for h in range(n_heads)], axis=-1)            # (Td, H*F)
        out_ref[...] = normed.astype(out_ref.dtype)        # one full-lane store


def gat_conv(x, adj, w, attn_l, attn_r, *,
             block_dst=512, block_src=1024, block_nodes=512):
    """x: (N, Din) f32, adj: (N, N) int8 (dst, src), w: (H, Din, F),
    attn_l/attn_r: (H, 1, F)  ->  (N, H, F) f32.

    Precondition: every dst row of adj has >= 1 nonzero entry (self-loops),
    matching the module's zero-in-degree assert."""
    N, Din = x.shape
    H, _, F = w.shape
    HF = H * F

    tn = min(block_nodes, N)
    td = min(block_dst, N)
    ts = min(block_src, N)
    assert N % tn == 0 and N % td == 0 and N % ts == 0, "N must divide the tile sizes"
    # TODO(synk): pad N up to the tile size for graphs whose node count is not
    # a multiple of the block sizes.

    # Fold fc + attention vectors into one fused weight so pass 1 is a single
    # wide MXU matmul per node tile (weight-only preprocessing, tiny).
    al = attn_l[:, 0, :]                                          # (H, F)
    ar = attn_r[:, 0, :]
    w_feat = jnp.transpose(w, (1, 0, 2)).reshape(Din, HF)         # (Din, H*F)
    w_el = jnp.einsum('hdf,hf->dh', w, al)                        # (Din, H)
    w_er = jnp.einsum('hdf,hf->dh', w, ar)                        # (Din, H)
    w_aug = jnp.concatenate([w_feat, w_el, w_er], axis=1)         # (Din, H*F+2H)

    # ---- pass 1: fused projection + attention scores (lane-dense feat) ------
    feat, scores = pl.pallas_call(
        _project_kernel,
        out_shape=(
            jax.ShapeDtypeStruct((N, HF), jnp.bfloat16),
            jax.ShapeDtypeStruct((N, 2 * H), jnp.float32),
        ),
        grid_spec=pltpu.PrefetchScalarGridSpec(
            num_scalar_prefetch=0,
            grid=(N // tn,),
            in_specs=[
                pl.BlockSpec((tn, Din), lambda n: (n, 0)),
                pl.BlockSpec((Din, HF + 2 * H), lambda n: (0, 0)),
            ],
            out_specs=(
                pl.BlockSpec((tn, HF), lambda n: (n, 0)),
                pl.BlockSpec((tn, 2 * H), lambda n: (n, 0)),
            )),
        compiler_params=pltpu.CompilerParams(
            dimension_semantics=("parallel",)),
    )(x, w_aug)

    # Tiny host-side relayouts (N*H elements) so pass 2 gets exactly the
    # orientations it wants: el with N on lanes, er with heads on lanes.
    el_row = jnp.transpose(scores[:, :H])                         # (H, N)
    er_col = scores[:, H:]                                        # (N, H)

    # ---- pass 2: tiled edge-softmax + aggregation ----------------------------
    out_flat = pl.pallas_call(
        _attention_kernel,
        out_shape=jax.ShapeDtypeStruct((N, HF), jnp.float32),
        grid_spec=pltpu.PrefetchScalarGridSpec(
            num_scalar_prefetch=0,
            grid=(N // td, N // ts),               # src axis innermost
            in_specs=[
                pl.BlockSpec((ts, HF), lambda d, s: (s, 0)),      # feat (src)
                pl.BlockSpec((H, ts), lambda d, s: (0, s)),       # el   (src)
                pl.BlockSpec((td, H), lambda d, s: (d, 0)),       # er   (dst)
                pl.BlockSpec((td, ts), lambda d, s: (d, s)),      # adj tile
            ],
            out_specs=pl.BlockSpec((td, HF), lambda d, s: (d, 0)),
            scratch_shapes=[
                pltpu.VMEM((td, H), jnp.float32),    # m (running max)
                pltpu.VMEM((td, H), jnp.float32),    # l (running denom)
                pltpu.VMEM((td, HF), jnp.float32),   # acc (lane-dense)
            ]),
        compiler_params=pltpu.CompilerParams(
            dimension_semantics=("parallel", "arbitrary"),
            # 48 MB: well above the default scoped limit (room for the (Td,Ts)
            # e/p temporaries at the big tiles) yet under v7x's 64 MiB VMEM.
            vmem_limit_bytes=48 * 1024 * 1024),
    )(feat, el_row, er_col, adj)

    return out_flat.reshape(N, H, F)   # free reshape: H*F already head-major


def gat_conv_ref(x, adj, w, attn_l, attn_r):
    """Pure-JAX f32 reference for the correctness check."""
    feat = jnp.einsum('nd,hdf->nhf', x, w)                        # (N, H, F)
    al = attn_l[:, 0, :]
    ar = attn_r[:, 0, :]
    el = jnp.einsum('nhf,hf->nh', feat, al)                       # (N, H)
    er = jnp.einsum('nhf,hf->nh', feat, ar)                       # (N, H)
    e = er[:, None, :] + el[None, :, :]                           # (dst, src, H)
    e = jnp.where(e >= 0, e, NEG_SLOPE * e)
    mask = (adj > 0)[:, :, None]
    e = jnp.where(mask, e, -1e30)
    e = e - jnp.max(e, axis=1, keepdims=True)
    p = jnp.where(mask, jnp.exp(e), 0.0)
    a = p / jnp.sum(p, axis=1, keepdims=True)
    return jnp.einsum('dsh,shf->dhf', a, feat)                    # (N, H, F)


if __name__ == "__main__":
    # N is sized so the default (512 dst x 1024 src) attention tiles give a
    # (4, 2) grid: exercises the online softmax across src steps, keeps the
    # dst axis wide enough for both v7x TensorCores, and uses the recommended
    # large tiles instead of tiny demo blocks.
    N, Din, F, H = 2048, 32, 32, 4   # nodes, in_feats, out_feats, heads (H*F=128 lanes)

    key = jax.random.PRNGKey(0)
    k1, k2, k3, k4, k5 = jax.random.split(key, 5)

    # xavier_normal_ with gain for 'relu' (sqrt(2)), as in reset_parameters()
    gain = math.sqrt(2.0)
    std_fc = gain * math.sqrt(2.0 / (Din + H * F))                # fc.weight (H*F, Din)
    w_fc = std_fc * jax.random.normal(k1, (H * F, Din), jnp.float32)
    # torch does x @ fc.weight.T then .view(N, H, F): row r -> (head r//F, feat r%F)
    w = jnp.transpose(w_fc.reshape(H, F, Din), (0, 2, 1))         # (H, Din, F)

    std_attn = gain * math.sqrt(2.0 / (H * F + F))                # attn_* (1, H, F)
    attn_l = std_attn * jax.random.normal(k2, (H, 1, F), jnp.float32)
    attn_r = std_attn * jax.random.normal(k3, (H, 1, F), jnp.float32)

    x = jax.random.normal(k4, (N, Din), jnp.float32)

    # random directed graph with self-loops (no zero in-degree), int8 adjacency
    adj = (jax.random.uniform(k5, (N, N)) < 0.02).astype(jnp.int8)
    adj = jnp.maximum(adj, jnp.eye(N, dtype=jnp.int8))

    out = gat_conv(x, adj, w, attn_l, attn_r)     # default (large) tile sizes
    out = jax.block_until_ready(out)

    ref = gat_conv_ref(x, adj, w, attn_l, attn_r)
    assert out.shape == (N, H, F)
    # bf16 operands on the p @ feat aggregation matmul -> looser tolerance
    # than a pure-f32 implementation.
    assert jnp.allclose(out, ref, atol=5e-2, rtol=5e-2), \
        float(jnp.max(jnp.abs(out - ref)))

    print("KERNEL_OK")
</pallas_src>

<mosaic_0001>
module attributes {stable_mosaic.version = 11 : i64} {
  func.func @_project_kernel(%arg0: i32, %arg1: memref<512x32xf32, #tpu.memory_space<vmem>>, %arg2: memref<32x136xf32, #tpu.memory_space<vmem>>, %arg3: memref<512x128xbf16, #tpu.memory_space<vmem>>, %arg4: memref<512x8xf32, #tpu.memory_space<vmem>>) attributes {dimension_semantics = [#tpu.dimension_semantics<parallel>], iteration_bounds = array<i64: 4>, scalar_prefetch = 0 : i64, scratch_operands = 0 : i64, tpu.core_type = #tpu.core_type<tc>, window_params = [{transform_indices = @transform_0, window_bounds = array<i64: 512, 32>}, {pipeline_mode = #tpu.pipeline_mode<synchronous>, transform_indices = @transform_1, window_bounds = array<i64: 32, 136>}, {transform_indices = @transform_2, window_bounds = array<i64: 512, 128>}, {transform_indices = @transform_3, window_bounds = array<i64: 512, 8>}]} {
    %c0 = arith.constant 0 : index
    %c0_0 = arith.constant 0 : index
    %0 = vector.load %arg1[%c0, %c0_0] : memref<512x32xf32, #tpu.memory_space<vmem>>, vector<512x32xf32>
    %c0_1 = arith.constant 0 : index
    %c0_2 = arith.constant 0 : index
    %1 = vector.load %arg2[%c0_1, %c0_2] : memref<32x136xf32, #tpu.memory_space<vmem>>, vector<32x136xf32>
    %cst = arith.constant dense<0.000000e+00> : vector<512x136xf32>
    %2 = tpu.matmul %0, %1, %cst {dimension_numbers = #tpu.dot_dimension_numbers<[1], [0], [0], [1], [0, 0, 1, 1], [], []>} : vector<512x32xf32>, vector<32x136xf32>, vector<512x136xf32> -> vector<512x136xf32>
    %3 = vector.extract_strided_slice %2 {offsets = [0, 0], sizes = [512, 128], strides = [1, 1]} : vector<512x136xf32> to vector<512x128xf32>
    %4 = arith.truncf %3 : vector<512x128xf32> to vector<512x128xbf16>
    %c0_3 = arith.constant 0 : index
    %c0_4 = arith.constant 0 : index
    %5 = vector.load %arg3[%c0_3, %c0_4] : memref<512x128xbf16, #tpu.memory_space<vmem>>, vector<512x128xbf16>
    tpu.vector_store %arg3[%c0_3, %c0_4], %4 {strides = array<i32>} : memref<512x128xbf16, #tpu.memory_space<vmem>>, vector<512x128xbf16>,
    %6 = vector.extract_strided_slice %2 {offsets = [0, 128], sizes = [512, 8], strides = [1, 1]} : vector<512x136xf32> to vector<512x8xf32>
    %c0_5 = arith.constant 0 : index
    %c0_6 = arith.constant 0 : index
    %7 = vector.load %arg4[%c0_5, %c0_6] : memref<512x8xf32, #tpu.memory_space<vmem>>, vector<512x8xf32>
    tpu.vector_store %arg4[%c0_5, %c0_6], %6 {strides = array<i32>} : memref<512x8xf32, #tpu.memory_space<vmem>>, vector<512x8xf32>,
    return
  }
  func.func @transform_0(%arg0: i32) -> (i32, i32) {
    %c0_i32 = arith.constant 0 : i32
    %c0_i32_0 = arith.constant 0 : i32
    return %arg0, %c0_i32 : i32, i32
  }
  func.func @transform_1(%arg0: i32) -> (i32, i32) {
    %c0_i32 = arith.constant 0 : i32
    %c0_i32_0 = arith.constant 0 : i32
    %c0_i32_1 = arith.constant 0 : i32
    return %c0_i32, %c0_i32_0 : i32, i32
  }
  func.func @transform_2(%arg0: i32) -> (i32, i32) {
    %c0_i32 = arith.constant 0 : i32
    %c0_i32_0 = arith.constant 0 : i32
    return %arg0, %c0_i32 : i32, i32
  }
  func.func @transform_3(%arg0: i32) -> (i32, i32) {
    %c0_i32 = arith.constant 0 : i32
    %c0_i32_0 = arith.constant 0 : i32
    return %arg0, %c0_i32 : i32, i32
  }
}

</mosaic_0001>

<llo_original>
// kernel: tpu_custom_call.1
$region0: #{tpu_custom_call.1}
  #allocation0 [shape = 'u32[]', space=smem, size = 0x4, offset = 0x4, fixed_abs, tag = 'smem constant byte address 0x4 - core index']
  #allocation1 [shape = 'u32[144,128]{1,0:T(1,128)}', space=vmem, size = 0x12000, scoped, tag = 'internal scratch']
  %s0 = inlined_call_operand.vmem [shape: f32[2048,32], index: 0, kind: input, shape index: {}]
  %s1 = inlined_call_operand.vmem [shape: f32[32,136], index: 1, kind: input, shape index: {}]
  %s2 = inlined_call_operand.hbm [shape: bf16[2048,128], index: 2, kind: output, shape index: {0}]
  %s3 = inlined_call_operand.vmem [shape: f32[2048,8], index: 3, kind: output, shape index: {1}]
  %4 = xla_tuple %s2, %s3
  %s5 = sld [smem:[#allocation0]]
  $region49: #{tpu_custom_call.1} parent=0
    _
  %s7 = ssub.s32 1, %s5
  %s8 = scalar_select 0, %s7, %s5
  $region1: #{tpu_custom_call.1} parent=0
    #allocation2 [shape = 'u8[262144]{0}', space=vmem, size = 0x40000, scoped, tag = 'output window, operand 0']
    #allocation3 [shape = 's32[2]{0}', space=sflag, size = 0x8, scoped, tag = 'scoped memory for tpu_custom_call.1']
    %9 = vsyncpa [#allocation3], 0
    %s10 = scalar_lea.sflag [#allocation3], 1
    %11 = vsyncpa %s10, 0
    loop: start=0, step=1, limit=6
    $region2: #{tpu_custom_call.1} parent=1 // loop_pre_header
      _
    $region3: #{tpu_custom_call.1} parent=1 // loop_header
      %s13 = sphi 0, %s17
      %p14 = scmp.ge.s32.totalorder %s13, 6
      %s23 = sphi 0, %s25
      %s26 = sphi 0, %s23
      %s27 = sphi 0, %s26
      %s43 = sphi 0, %s27
      %s47 = sphi 0, %s47
      %s49 = sphi 0, %s47
      %s50 = sphi 0, %s49
      %s64 = sphi 0, %s50
      %s70 = sphi 0, %s72
      %s73 = sphi 0, %s70
      %s74 = sphi 0, %s73
      %s90 = sphi 0, %s74
      %s96 = sphi 0, %s98
      %s99 = sphi 0, %s96
      %s100 = sphi 0, %s99
      %s116 = sphi 0, %s100
    $region4: #{tpu_custom_call.1} parent=1 // loop_header_branch
      %16 = sbr.rel (%p14) target = $region8
    $region5: #{tpu_custom_call.1} parent=1 // loop_body
      %s18 = ssub.s32 %s13, 1
      %s19 = ssub.s32 %s13, 2
      %s20 = sadd.s32 %s13, 1
      %s21 = ssub.s32 %s13, %s20
      %p22 = scmp.eq.s32.totalorder %s21, 0
      %s24 = sadd.s32 %s23, 1
      %s25 = scalar_select %p22, %s23, %s24
      %p28 = pneg %p22
      %p29 = scmp.eq.s32.totalorder %s13, 3
      %p30 = por %p28, %p29
      %p31 = scmp.ne.s32.totalorder %s23, %s26
      %p32 = scmp.eq.s32.totalorder %s13, 0
      %p33 = por %p31, %p32
      %p34 = scmp.ne.s32.totalorder %s23, %s26
      %p35 = scmp.eq.s32.totalorder %s18, 3
      %p36 = por %p34, %p35
      %p37 = scmp.ne.s32.totalorder %s26, %s27
      %p38 = scmp.eq.s32.totalorder %s18, 0
      %p39 = por %p37, %p38
      %p40 = scmp.ne.s32.totalorder %s26, %s27
      %p41 = scmp.eq.s32.totalorder %s19, 3
      %p42 = por %p40, %p41
      %p44 = scmp.ne.s32.totalorder %s27, %s43
      %p45 = scmp.eq.s32.totalorder %s19, 0
      %p46 = por %p44, %p45
      %s48 = sadd.s32 %s47, 1
      %p51 = scmp.eq.s32.totalorder %s13, 3
      %p52 = scmp.ne.s32.totalorder %s47, %s49
      %p53 = scmp.eq.s32.totalorder %s13, 0
      %p54 = por %p52, %p53
      %p55 = scmp.ne.s32.totalorder %s47, %s49
      %p56 = scmp.eq.s32.totalorder %s18, 3
      %p57 = por %p55, %p56
      %p58 = scmp.ne.s32.totalorder %s49, %s50
      %p59 = scmp.eq.s32.totalorder %s18, 0
      %p60 = por %p58, %p59
      %p61 = scmp.ne.s32.totalorder %s49, %s50
      %p62 = scmp.eq.s32.totalorder %s19, 3
      %p63 = por %p61, %p62
      %p65 = scmp.ne.s32.totalorder %s50, %s64
      %p66 = scmp.eq.s32.totalorder %s19, 0
      %p67 = por %p65, %p66
      %s68 = ssub.s32 %s13, %s20
      %p69 = scmp.eq.s32.totalorder %s68, 0
      %s71 = sadd.s32 %s70, 1
      %s72 = scalar_select %p69, %s70, %s71
      %p75 = pneg %p69
      %p76 = scmp.eq.s32.totalorder %s13, 3
      %p77 = por %p75, %p76
      %p78 = scmp.ne.s32.totalorder %s70, %s73
      %p79 = scmp.eq.s32.totalorder %s13, 0
      %p80 = por %p78, %p79
      %p81 = scmp.ne.s32.totalorder %s70, %s73
      %p82 = scmp.eq.s32.totalorder %s18, 3
      %p83 = por %p81, %p82
      %p84 = scmp.ne.s32.totalorder %s73, %s74
      %p85 = scmp.eq.s32.totalorder %s18, 0
      %p86 = por %p84, %p85
      %p87 = scmp.ne.s32.totalorder %s73, %s74
      %p88 = scmp.eq.s32.totalorder %s19, 3
      %p89 = por %p87, %p88
      %p91 = scmp.ne.s32.totalorder %s74, %s90
      %p92 = scmp.eq.s32.totalorder %s19, 0
      %p93 = por %p91, %p92
      %s94 = ssub.s32 %s13, %s20
      %p95 = scmp.eq.s32.totalorder %s94, 0
      %s97 = sadd.s32 %s96, 1
      %s98 = scalar_select %p95, %s96, %s97
      %p101 = pneg %p95
      %p102 = scmp.eq.s32.totalorder %s13, 3
      %p103 = por %p101, %p102
      %p104 = scmp.ne.s32.totalorder %s96, %s99
      %p105 = scmp.eq.s32.totalorder %s13, 0
      %p106 = por %p104, %p105
      %p107 = scmp.ne.s32.totalorder %s96, %s99
      %p108 = scmp.eq.s32.totalorder %s18, 3
      %p109 = por %p107, %p108
      %p110 = scmp.ne.s32.totalorder %s99, %s100
      %p111 = scmp.eq.s32.totalorder %s18, 0
      %p112 = por %p110, %p111
      %p113 = scmp.ne.s32.totalorder %s99, %s100
      %p114 = scmp.eq.s32.totalorder %s19, 3
      %p115 = por %p113, %p114
      %p117 = scmp.ne.s32.totalorder %s100, %s116
      %p118 = scmp.eq.s32.totalorder %s19, 0
      %p119 = por %p117, %p118
      %p120 = scmp.le.s32.totalorder 1, %s13
      %p121 = scmp.lt.s32.totalorder %s13, 5
      %p122 = pnand %p120, %p121
      %p123 = pneg %p122
      // Predicated region
      $region9: #{tpu_custom_call.1} parent=5 // pred_check
        _
      $region10: #{tpu_custom_call.1} parent=5 // pred_check_branch
        %125 = sbr.rel (%p122) target = $region12
      $region11: #{tpu_custom_call.1} parent=5 // pred_region
        %s126 = ssub.s32 %s13, 1
        // Predicated region
        $region13: #{tpu_custom_call.1} parent=11 // pred_check
          %p127 = pneg %p60
        $region14: #{tpu_custom_call.1} parent=11 // pred_check_branch
          %129 = sbr.rel (%p127) target = $region16
        $region15: #{tpu_custom_call.1} parent=11 // pred_region
          _
        $region16: #{tpu_custom_call.1} parent=11 // pred_fallthru
          _
      $region12: #{tpu_custom_call.1} parent=5 // pred_fallthru
        _
      %p130 = scmp.lt.s32.totalorder %s13, 4
      // Predicated region
      $region17: #{tpu_custom_call.1} parent=5 // pred_check
        %p131 = pneg %p130
      $region18: #{tpu_custom_call.1} parent=5 // pred_check_branch
        %133 = sbr.rel (%p131) target = $region20
      $region19: #{tpu_custom_call.1} parent=5 // pred_region
        // Predicated region
        $region21: #{tpu_custom_call.1} parent=19 // pred_check
          %p134 = pneg %p33
        $region22: #{tpu_custom_call.1} parent=19 // pred_check_branch
          %136 = sbr.rel (%p134) target = $region24
        $region23: #{tpu_custom_call.1} parent=19 // pred_region
          %s137 = smul.u32 64, %s13
          %p138 = scmp.lt.s32.totalorder %s137, 255
          %s139 = scalar_select %p138, %s137, 255
          %s140 = smul.addr %s139, 8
          %s141 = scalar_lea.vmem %s0, %s140
          %s142 = smul.u32 64, %s13
        $region24: #{tpu_custom_call.1} parent=19 // pred_fallthru
          _
      $region20: #{tpu_custom_call.1} parent=5 // pred_fallthru
        _
      %p143 = scmp.le.s32.totalorder 1, %s13
      %p144 = scmp.lt.s32.totalorder %s13, 5
      %p145 = pnand %p143, %p144
      %p146 = pneg %p145
      // Predicated region
      $region25: #{tpu_custom_call.1} parent=5 // pred_check
        _
      $region26: #{tpu_custom_call.1} parent=5 // pred_check_branch
        %148 = sbr.rel (%p145) target = $region28
      $region27: #{tpu_custom_call.1} parent=5 // pred_region
        %s149 = ssub.s32 %s13, 1
        %s150 = smul.u32 64, %s18
        %p151 = scmp.lt.s32.totalorder %s150, 255
        %s152 = scalar_select %p151, %s150, 255
        %s153 = smul.addr %s152, 8
        %s154 = scalar_lea.vmem %s0, %s153
        %p155 = pneg %p39
        %p156 = pneg %p36
        %p157 = pneg %p60
        %p158 = pneg %p57
        %p159 = pneg %p86
        %p160 = pneg %p83
        %s161 = sand.u32 %s73, 1
        %s162 = scalar_lea.sflag [#allocation3], %s161
        %s163 = sand.u32 %s73, 1
        %s164 = smul.addr %s163, 256
        %s165 = scalar_lea.vmem [#allocation2], %s164
        %p166 = pneg %p112
        %p167 = pneg %p109
        %s168 = smul.u32 64, %s18
        %p169 = scmp.lt.s32.totalorder %s168, 255
        %s170 = scalar_select %p169, %s168, 255
        %s171 = smul.addr %s170, 8
        %s172 = scalar_lea.vmem %s3, %s171
        %s173 = smul.u32 64, %s18
        %p174 = scmp.lt.s32.totalorder %s173, 255
        %s175 = scalar_select %p174, %s173, 255
        %s176 = smul.addr %s175, 8
        %s177 = scalar_lea.vmem %s0, %s176
        %s178 = smul.u32 64, %s18
        %s179 = smul.u32 64, %s18
        %s180 = smul.u32 64, %s18
        %p181 = scmp.lt.s32.totalorder %s180, 255
        %s182 = scalar_select %p181, %s180, 255
        %s183 = smul.addr %s182, 8
        %s184 = scalar_lea.vmem %s3, %s183
        %s185 = smul.u32 64, %s18
        %v186 = vld [vmem:[%s177] sm:$0xff]
        %v187 = vld [vmem:[%s177 + $0x8] sm:$0xff]
        %v188 = vld [vmem:[%s177 + $0x10] sm:$0xff]
        %v189 = vld [vmem:[%s177 + $0x18] sm:$0xff]
        %v190 = vld [vmem:[%s177 + $0x20] sm:$0xff]
        %v191 = vld [vmem:[%s177 + $0x28] sm:$0xff]
        %v192 = vld [vmem:[%s177 + $0x30] sm:$0xff]
        %v193 = vld [vmem:[%s177 + $0x38] sm:$0xff]
        %v194 = vld [vmem:[%s177 + $0x40] sm:$0xff]
        %v195 = vld [vmem:[%s177 + $0x48] sm:$0xff]
        %v196 = vld [vmem:[%s177 + $0x50] sm:$0xff]
        %v197 = vld [vmem:[%s177 + $0x58] sm:$0xff]
        %v198 = vld [vmem:[%s177 + $0x60] sm:$0xff]
        %v199 = vld [vmem:[%s177 + $0x68] sm:$0xff]
        %v200 = vld [vmem:[%s177 + $0x70] sm:$0xff]
        %v201 = vld [vmem:[%s177 + $0x78] sm:$0xff]
        %v202 = vld [vmem:[%s177 + $0x80] sm:$0xff]
        %v203 = vld [vmem:[%s177 + $0x88] sm:$0xff]
        %v204 = vld [vmem:[%s177 + $0x90] sm:$0xff]
        %v205 = vld [vmem:[%s177 + $0x98] sm:$0xff]
        %v206 = vld [vmem:[%s177 + $0xa0] sm:$0xff]
        %v207 = vld [vmem:[%s177 + $0xa8] sm:$0xff]
        %v208 = vld [vmem:[%s177 + $0xb0] sm:$0xff]
        %v209 = vld [vmem:[%s177 + $0xb8] sm:$0xff]
        %v210 = vld [vmem:[%s177 + $0xc0] sm:$0xff]
        %v211 = vld [vmem:[%s177 + $0xc8] sm:$0xff]
        %v212 = vld [vmem:[%s177 + $0xd0] sm:$0xff]
        %v213 = vld [vmem:[%s177 + $0xd8] sm:$0xff]
        %v214 = vld [vmem:[%s177 + $0xe0] sm:$0xff]
        %v215 = vld [vmem:[%s177 + $0xe8] sm:$0xff]
        %v216 = vld [vmem:[%s177 + $0xf0] sm:$0xff]
        %v217 = vld [vmem:[%s177 + $0xf8] sm:$0xff]
        %v218 = vld [vmem:[%s177 + $0x100] sm:$0xff]
        %v219 = vld [vmem:[%s177 + $0x108] sm:$0xff]
        %v220 = vld [vmem:[%s177 + $0x110] sm:$0xff]
        %v221 = vld [vmem:[%s177 + $0x118] sm:$0xff]
        %v222 = vld [vmem:[%s177 + $0x120] sm:$0xff]
        %v223 = vld [vmem:[%s177 + $0x128] sm:$0xff]
        %v224 = vld [vmem:[%s177 + $0x130] sm:$0xff]
        %v225 = vld [vmem:[%s177 + $0x138] sm:$0xff]
        %v226 = vld [vmem:[%s177 + $0x140] sm:$0xff]
        %v227 = vld [vmem:[%s177 + $0x148] sm:$0xff]
        %v228 = vld [vmem:[%s177 + $0x150] sm:$0xff]
        %v229 = vld [vmem:[%s177 + $0x158] sm:$0xff]
        %v230 = vld [vmem:[%s177 + $0x160] sm:$0xff]
        %v231 = vld [vmem:[%s177 + $0x168] sm:$0xff]
        %v232 = vld [vmem:[%s177 + $0x170] sm:$0xff]
        %v233 = vld [vmem:[%s177 + $0x178] sm:$0xff]
        %v234 = vld [vmem:[%s177 + $0x180] sm:$0xff]
        %v235 = vld [vmem:[%s177 + $0x188] sm:$0xff]
        %v236 = vld [vmem:[%s177 + $0x190] sm:$0xff]
        %v237 = vld [vmem:[%s177 + $0x198] sm:$0xff]
        %v238 = vld [vmem:[%s177 + $0x1a0] sm:$0xff]
        %v239 = vld [vmem:[%s177 + $0x1a8] sm:$0xff]
        %v240 = vld [vmem:[%s177 + $0x1b0] sm:$0xff]
        %v241 = vld [vmem:[%s177 + $0x1b8] sm:$0xff]
        %v242 = vld [vmem:[%s177 + $0x1c0] sm:$0xff]
        %v243 = vld [vmem:[%s177 + $0x1c8] sm:$0xff]
        %v244 = vld [vmem:[%s177 + $0x1d0] sm:$0xff]
        %v245 = vld [vmem:[%s177 + $0x1d8] sm:$0xff]
        %v246 = vld [vmem:[%s177 + $0x1e0] sm:$0xff]
        %v247 = vld [vmem:[%s177 + $0x1e8] sm:$0xff]
        %v248 = vld [vmem:[%s177 + $0x1f0] sm:$0xff]
        %v249 = vld [vmem:[%s177 + $0x1f8] sm:$0xff]
        %v250 = vld [vmem:[%s1] sm:$0xff]
        %v251 = vld [vmem:[%s1 + $0x8] sm:$0xff]
        %v252 = vld [vmem:[%s1 + $0x10] sm:$0xff]
        %v253 = vld [vmem:[%s1 + $0x18] sm:$0xff]
        %v254 = vld [vmem:[%s1 + $0x20] sm:$0xff]
        %v255 = vld [vmem:[%s1 + $0x28] sm:$0xff]
        %v256 = vld [vmem:[%s1 + $0x30] sm:$0xff]
        %v257 = vld [vmem:[%s1 + $0x38] sm:$0xff]
        %vm258 = vcmask 261120
        %v260 = vsel %vm258, %v186, 0
        %v263 = vsel %vm258, %v187, 0
        %v266 = vsel %vm258, %v188, 0
        %v269 = vsel %vm258, %v189, 0
        %v272 = vsel %vm258, %v190, 0
        %v275 = vsel %vm258, %v191, 0
        %v278 = vsel %vm258, %v192, 0
        %v281 = vsel %vm258, %v193, 0
        %v284 = vsel %vm258, %v194, 0
        %v287 = vsel %vm258, %v195, 0
        %v290 = vsel %vm258, %v196, 0
        %v293 = vsel %vm258, %v197, 0
        %v296 = vsel %vm258, %v198, 0
        %v299 = vsel %vm258, %v199, 0
        %v302 = vsel %vm258, %v200, 0
        %v305 = vsel %vm258, %v201, 0
        %v308 = vsel %vm258, %v202, 0
        %v311 = vsel %vm258, %v203, 0
        %v314 = vsel %vm258, %v204, 0
        %v317 = vsel %vm258, %v205, 0
        %v320 = vsel %vm258, %v206, 0
        %v323 = vsel %vm258, %v207, 0
        %v326 = vsel %vm258, %v208, 0
        %v329 = vsel %vm258, %v209, 0
        %v332 = vsel %vm258, %v210, 0
        %v335 = vsel %vm258, %v211, 0
        %v338 = vsel %vm258, %v212, 0
        %v341 = vsel %vm258, %v213, 0
        %v344 = vsel %vm258, %v214, 0
        %v347 = vsel %vm258, %v215, 0
        %v350 = vsel %vm258, %v216, 0
        %v353 = vsel %vm258, %v217, 0
        %v356 = vsel %vm258, %v218, 0
        %v359 = vsel %vm258, %v219, 0
        %v362 = vsel %vm258, %v220, 0
        %v365 = vsel %vm258, %v221, 0
        %v368 = vsel %vm258, %v222, 0
        %v371 = vsel %vm258, %v223, 0
        %v374 = vsel %vm258, %v224, 0
        %v377 = vsel %vm258, %v225, 0
        %v380 = vsel %vm258, %v226, 0
        %v383 = vsel %vm258, %v227, 0
        %v386 = vsel %vm258, %v228, 0
        %v389 = vsel %vm258, %v229, 0
        %v392 = vsel %vm258, %v230, 0
        %v395 = vsel %vm258, %v231, 0
        %v398 = vsel %vm258, %v232, 0
        %v401 = vsel %vm258, %v233, 0
        %v404 = vsel %vm258, %v234, 0
        %v407 = vsel %vm258, %v235, 0
        %v410 = vsel %vm258, %v236, 0
        %v413 = vsel %vm258, %v237, 0
        %v416 = vsel %vm258, %v238, 0
        %v419 = vsel %vm258, %v239, 0
        %v422 = vsel %vm258, %v240, 0
        %v425 = vsel %vm258, %v241, 0
        %v428 = vsel %vm258, %v242, 0
        %v431 = vsel %vm258, %v243, 0
        %v434 = vsel %vm258, %v244, 0
        %v437 = vsel %vm258, %v245, 0
        %v440 = vsel %vm258, %v246, 0
        %v443 = vsel %vm258, %v247, 0
        %v446 = vsel %vm258, %v248, 0
        %v449 = vsel %vm258, %v249, 0
        %451 = vmatprep.subr.mxu0 %v251
        %452 = vmatpush1.msra.mxu0 %v250
        %453 = vmatprep.subr.mxu0 %v253
        %454 = vmatpush1.msra.mxu0 %v252
        %455 = vmatprep.subr.mxu0 %v255
        %456 = vmatpush1.msra.mxu0 %v254
        %457 = vmatprep.subr.mxu0 %v257
        %458 = vmatpush1.msra.mxu0 %v256
        %459 = vmatprep.subr.mxu0 0.0
        %460 = vmatpush1.msra.mxu0 0.0
        %461 = vmatprep.subr.mxu0 0.0
        %462 = vmatpush1.msra.mxu0 0.0
        %463 = vmatprep.subr.mxu0 0.0
        %464 = vmatpush1.msra.mxu0 0.0
        %465 = vmatprep.subr.mxu0 0.0
        %466 = vmatpush1.msra.mxu0 0.0
        %467 = vmatprep.subr.mxu0 0.0
        %468 = vmatpush1.msra.mxu0 0.0
        %469 = vmatprep.subr.mxu0 0.0
        %470 = vmatpush1.msra.mxu0 0.0
        %471 = vmatprep.subr.mxu0 0.0
        %472 = vmatpush1.msra.mxu0 0.0
        %473 = vmatprep.subr.mxu0 0.0
        %474 = vmatpush1.msra.mxu0 0.0
        %475 = vmatprep.subr.mxu0 0.0
        %476 = vmatpush1.msra.mxu0 0.0
        %477 = vmatprep.subr.mxu0 0.0
        %478 = vmatpush1.msra.mxu0 0.0
        %479 = vmatprep.subr.mxu0 0.0
        %480 = vmatpush1.msra.mxu0 0.0
        %481 = vmatprep.subr.mxu0 0.0
        %482 = vmatpush1.msra.mxu0 0.0
        %483 = vmatprep.subr.mxu0 0.0
        %484 = vmatpush1.msra.mxu0 0.0
        %485 = vmatprep.subr.mxu0 0.0
        %486 = vmatpush1.msra.mxu0 0.0
        %487 = vmatprep.subr.mxu0 0.0
        %488 = vmatpush1.msra.mxu0 0.0
        %489 = vmatprep.subr.mxu0 0.0
        %490 = vmatpush1.msra.mxu0 0.0
        %491 = vmatprep.subr.mxu0 0.0
        %492 = vmatpush1.msra.mxu0 0.0
        %493 = vmatprep.subr.mxu0 0.0
        %494 = vmatpush1.msra.mxu0 0.0
        %495 = vmatprep.subr.mxu0 0.0
        %496 = vmatpush1.msra.mxu0 0.0
        %497 = vmatprep.subr.mxu0 0.0
        %498 = vmatpush1.msra.mxu0 0.0
        %499 = vmatprep.subr.mxu0 0.0
        %500 = vmatpush1.msra.mxu0 0.0
        %501 = vmatprep.subr.mxu0 0.0
        %502 = vmatpush1.msra.mxu0 0.0
        %503 = vmatprep.subr.mxu0 0.0
        %504 = vmatpush1.msra.mxu0 0.0
        %505 = vmatprep.subr.mxu0 0.0
        %506 = vmatpush1.msra.mxu0 0.0
        %507 = vmatprep.subr.mxu0 0.0
        %508 = vmatpush1.msra.mxu0 0.0
        %509 = vmatprep.subr.mxu0 0.0
        %510 = vmatpush1.msra.mxu0 0.0
        %511 = vmatprep.subr.mxu0 0.0
        %512 = vmatpush1.msra.mxu0 0.0
        %513 = vmatprep.subr.mxu0 0.0
        %514 = vmatpush1.msra.mxu0 0.0
        %515 = vmatprep.mubr.f32.mxu0 0.0
        %516 = vmatmul.mubr.f32.gmra.mrb[0].mxu0 %v260
        %v517 = vpop.f32.mrb[0].mxu0
        %v518 = vadd.f32 0.0, %v517
        %v519 = vpop.f32.mrb[0].mxu0
        %v520 = vadd.f32 0.0, %v519
        %521 = vmatprep.mubr.f32.mxu0 0.0
        %522 = vmatmul.mubr.f32.gmra.mrb[0].mxu0 %v263
        %v523 = vpop.f32.mrb[0].mxu0
        %v524 = vadd.f32 0.0, %v523
        %v525 = vpop.f32.mrb[0].mxu0
        %v526 = vadd.f32 0.0, %v525
        %527 = vmatprep.mubr.f32.mxu0 0.0
        %528 = vmatmul.mubr.f32.gmra.mrb[0].mxu0 %v266
        %v529 = vpop.f32.mrb[0].mxu0
        %v530 = vadd.f32 0.0, %v529
        %v531 = vpop.f32.mrb[0].mxu0
        %v532 = vadd.f32 0.0, %v531
        %533 = vmatprep.mubr.f32.mxu0 0.0
        %534 = vmatmul.mubr.f32.gmra.mrb[0].mxu0 %v269
        %v535 = vpop.f32.mrb[0].mxu0
        %v536 = vadd.f32 0.0, %v535
        %v537 = vpop.f32.mrb[0].mxu0
        %v538 = vadd.f32 0.0, %v537
        %539 = vmatprep.mubr.f32.mxu0 0.0
        %540 = vmatmul.mubr.f32.gmra.mrb[0].mxu0 %v272
        %v541 = vpop.f32.mrb[0].mxu0
        %v542 = vadd.f32 0.0, %v541
        %v543 = vpop.f32.mrb[0].mxu0
        %v544 = vadd.f32 0.0, %v543
        %545 = vmatprep.mubr.f32.mxu0 0.0
        %546 = vmatmul.mubr.f32.gmra.mrb[0].mxu0 %v275
        %v547 = vpop.f32.mrb[0].mxu0
        %v548 = vadd.f32 0.0, %v547
        %v549 = vpop.f32.mrb[0].mxu0
        %v550 = vadd.f32 0.0, %v549
        %551 = vmatprep.mubr.f32.mxu0 0.0
        %552 = vmatmul.mubr.f32.gmra.mrb[0].mxu0 %v278
        %v553 = vpop.f32.mrb[0].mxu0
        %v554 = vadd.f32 0.0, %v553
        %v555 = vpop.f32.mrb[0].mxu0
        %v556 = vadd.f32 0.0, %v555
        %557 = vmatprep.mubr.f32.mxu0 0.0
        %558 = vmatmul.mubr.f32.gmra.mrb[0].mxu0 %v281
        %v559 = vpop.f32.mrb[0].mxu0
        %v560 = vadd.f32 0.0, %v559
        %v561 = vpop.f32.mrb[0].mxu0
        %v562 = vadd.f32 0.0, %v561
        %563 = vmatprep.mubr.f32.mxu0 0.0
        %564 = vmatmul.mubr.f32.gmra.mrb[0].mxu0 %v284
        %v565 = vpop.f32.mrb[0].mxu0
        %v566 = vadd.f32 0.0, %v565
        %v567 = vpop.f32.mrb[0].mxu0
        %v568 = vadd.f32 0.0, %v567
        %569 = vmatprep.mubr.f32.mxu0 0.0
        %570 = vmatmul.mubr.f32.gmra.mrb[0].mxu0 %v287
        %v571 = vpop.f32.mrb[0].mxu0
        %v572 = vadd.f32 0.0, %v571
        %v573 = vpop.f32.mrb[0].mxu0
        %v574 = vadd.f32 0.0, %v573
        %575 = vmatprep.mubr.f32.mxu0 0.0
        %576 = vmatmul.mubr.f32.gmra.mrb[0].mxu0 %v290
        %v577 = vpop.f32.mrb[0].mxu0
        %v578 = vadd.f32 0.0, %v577
        %v579 = vpop.f32.mrb[0].mxu0
        %v580 = vadd.f32 0.0, %v579
        %581 = vmatprep.mubr.f32.mxu0 0.0
        %582 = vmatmul.mubr.f32.gmra.mrb[0].mxu0 %v293
        %v583 = vpop.f32.mrb[0].mxu0
        %v584 = vadd.f32 0.0, %v583
        %v585 = vpop.f32.mrb[0].mxu0
        %v586 = vadd.f32 0.0, %v585
        %587 = vmatprep.mubr.f32.mxu0 0.0
        %588 = vmatmul.mubr.f32.gmra.mrb[0].mxu0 %v296
        %v589 = vpop.f32.mrb[0].mxu0
        %v590 = vadd.f32 0.0, %v589
        %v591 = vpop.f32.mrb[0].mxu0
        %v592 = vadd.f32 0.0, %v591
        %593 = vmatprep.mubr.f32.mxu0 0.0
        %594 = vmatmul.mubr.f32.gmra.mrb[0].mxu0 %v299
        %v595 = vpop.f32.mrb[0].mxu0
        %v596 = vadd.f32 0.0, %v595
        %v597 = vpop.f32.mrb[0].mxu0
        %v598 = vadd.f32 0.0, %v597
        %599 = vmatprep.mubr.f32.mxu0 0.0
        %600 = vmatmul.mubr.f32.gmra.mrb[0].mxu0 %v302
        %v601 = vpop.f32.mrb[0].mxu0
        %v602 = vadd.f32 0.0, %v601
        %v603 = vpop.f32.mrb[0].mxu0
        %v604 = vadd.f32 0.0, %v603
        %605 = vmatprep.mubr.f32.mxu0 0.0
        %606 = vmatmul.mubr.f32.gmra.mrb[0].mxu0 %v305
        %v607 = vpop.f32.mrb[0].mxu0
        %v608 = vadd.f32 0.0, %v607
        %v609 = vpop.f32.mrb[0].mxu0
        %v610 = vadd.f32 0.0, %v609
        %611 = vmatprep.mubr.f32.mxu0 0.0
        %612 = vmatmul.mubr.f32.gmra.mrb[0].mxu0 %v308
        %v613 = vpop.f32.mrb[0].mxu0
        %v614 = vadd.f32 0.0, %v613
        %v615 = vpop.f32.mrb[0].mxu0
        %v616 = vadd.f32 0.0, %v615
        %617 = vmatprep.mubr.f32.mxu0 0.0
        %618 = vmatmul.mubr.f32.gmra.mrb[0].mxu0 %v311
        %v619 = vpop.f32.mrb[0].mxu0
        %v620 = vadd.f32 0.0, %v619
        %v621 = vpop.f32.mrb[0].mxu0
        %v622 = vadd.f32 0.0, %v621
        %623 = vmatprep.mubr.f32.mxu0 0.0
        %624 = vmatmul.mubr.f32.gmra.mrb[0].mxu0 %v314
        %v625 = vpop.f32.mrb[0].mxu0
        %v626 = vadd.f32 0.0, %v625
        %v627 = vpop.f32.mrb[0].mxu0
        %v628 = vadd.f32 0.0, %v627
        %629 = vmatprep.mubr.f32.mxu0 0.0
        %630 = vmatmul.mubr.f32.gmra.mrb[0].mxu0 %v317
        %v631 = vpop.f32.mrb[0].mxu0
        %v632 = vadd.f32 0.0, %v631
        %v633 = vpop.f32.mrb[0].mxu0
        %v634 = vadd.f32 0.0, %v633
        %635 = vmatprep.mubr.f32.mxu0 0.0
        %636 = vmatmul.mubr.f32.gmra.mrb[0].mxu0 %v320
        %v637 = vpop.f32.mrb[0].mxu0
        %v638 = vadd.f32 0.0, %v637
        %v639 = vpop.f32.mrb[0].mxu0
        %v640 = vadd.f32 0.0, %v639
        %641 = vmatprep.mubr.f32.mxu0 0.0
        %642 = vmatmul.mubr.f32.gmra.mrb[0].mxu0 %v323
        %v643 = vpop.f32.mrb[0].mxu0
        %v644 = vadd.f32 0.0, %v643
        %v645 = vpop.f32.mrb[0].mxu0
        %v646 = vadd.f32 0.0, %v645
        %647 = vmatprep.mubr.f32.mxu0 0.0
        %648 = vmatmul.mubr.f32.gmra.mrb[0].mxu0 %v326
        %v649 = vpop.f32.mrb[0].mxu0
        %v650 = vadd.f32 0.0, %v649
        %v651 = vpop.f32.mrb[0].mxu0
        %v652 = vadd.f32 0.0, %v651
        %653 = vmatprep.mubr.f32.mxu0 0.0
        %654 = vmatmul.mubr.f32.gmra.mrb[0].mxu0 %v329
        %v655 = vpop.f32.mrb[0].mxu0
        %v656 = vadd.f32 0.0, %v655
        %v657 = vpop.f32.mrb[0].mxu0
        %v658 = vadd.f32 0.0, %v657
        %659 = vmatprep.mubr.f32.mxu0 0.0
        %660 = vmatmul.mubr.f32.gmra.mrb[0].mxu0 %v332
        %v661 = vpop.f32.mrb[0].mxu0
        %v662 = vadd.f32 0.0, %v661
        %v663 = vpop.f32.mrb[0].mxu0
        %v664 = vadd.f32 0.0, %v663
        %665 = vmatprep.mubr.f32.mxu0 0.0
        %666 = vmatmul.mubr.f32.gmra.mrb[0].mxu0 %v335
        %v667 = vpop.f32.mrb[0].mxu0
        %v668 = vadd.f32 0.0, %v667
        %v669 = vpop.f32.mrb[0].mxu0
        %v670 = vadd.f32 0.0, %v669
        %671 = vmatprep.mubr.f32.mxu0 0.0
        %672 = vmatmul.mubr.f32.gmra.mrb[0].mxu0 %v338
        %v673 = vpop.f32.mrb[0].mxu0
        %v674 = vadd.f32 0.0, %v673
        %v675 = vpop.f32.mrb[0].mxu0
        %v676 = vadd.f32 0.0, %v675
        %677 = vmatprep.mubr.f32.mxu0 0.0
        %678 = vmatmul.mubr.f32.gmra.mrb[0].mxu0 %v341
        %v679 = vpop.f32.mrb[0].mxu0
        %v680 = vadd.f32 0.0, %v679
        %v681 = vpop.f32.mrb[0].mxu0
        %v682 = vadd.f32 0.0, %v681
        %683 = vmatprep.mubr.f32.mxu0 0.0
        %684 = vmatmul.mubr.f32.gmra.mrb[0].mxu0 %v344
        %v685 = vpop.f32.mrb[0].mxu0
        %v686 = vadd.f32 0.0, %v685
        %v687 = vpop.f32.mrb[0].mxu0
        %v688 = vadd.f32 0.0, %v687
        %689 = vmatprep.mubr.f32.mxu0 0.0
        %690 = vmatmul.mubr.f32.gmra.mrb[0].mxu0 %v347
        %v691 = vpop.f32.mrb[0].mxu0
        %v692 = vadd.f32 0.0, %v691
        %v693 = vpop.f32.mrb[0].mxu0
        %v694 = vadd.f32 0.0, %v693
        %695 = vmatprep.mubr.f32.mxu0 0.0
        %696 = vmatmul.mubr.f32.gmra.mrb[0].mxu0 %v350
        %v697 = vpop.f32.mrb[0].mxu0
        %v698 = vadd.f32 0.0, %v697
        %v699 = vpop.f32.mrb[0].mxu0
        %v700 = vadd.f32 0.0, %v699
        %701 = vmatprep.mubr.f32.mxu0 0.0
        %702 = vmatmul.mubr.f32.gmra.mrb[0].mxu0 %v353
        %v703 = vpop.f32.mrb[0].mxu0
        %v704 = vadd.f32 0.0, %v703
        %v705 = vpop.f32.mrb[0].mxu0
        %v706 = vadd.f32 0.0, %v705
        %707 = vmatprep.mubr.f32.mxu0 0.0
        %708 = vmatmul.mubr.f32.gmra.mrb[0].mxu0 %v356
        %v709 = vpop.f32.mrb[0].mxu0
        %v710 = vadd.f32 0.0, %v709
        %v711 = vpop.f32.mrb[0].mxu0
        %v712 = vadd.f32 0.0, %v711
        %713 = vmatprep.mubr.f32.mxu0 0.0
        %714 = vmatmul.mubr.f32.gmra.mrb[0].mxu0 %v359
        %v715 = vpop.f32.mrb[0].mxu0
        %v716 = vadd.f32 0.0, %v715
        %v717 = vpop.f32.mrb[0].mxu0
        %v718 = vadd.f32 0.0, %v717
        %719 = vmatprep.mubr.f32.mxu0 0.0
        %720 = vmatmul.mubr.f32.gmra.mrb[0].mxu0 %v362
        %v721 = vpop.f32.mrb[0].mxu0
        %v722 = vadd.f32 0.0, %v721
        %v723 = vpop.f32.mrb[0].mxu0
        %v724 = vadd.f32 0.0, %v723
        %725 = vmatprep.mubr.f32.mxu0 0.0
        %726 = vmatmul.mubr.f32.gmra.mrb[0].mxu0 %v365
        %v727 = vpop.f32.mrb[0].mxu0
        %v728 = vadd.f32 0.0, %v727
        %v729 = vpop.f32.mrb[0].mxu0
        %v730 = vadd.f32 0.0, %v729
        %731 = vmatprep.mubr.f32.mxu0 0.0
        %732 = vmatmul.mubr.f32.gmra.mrb[0].mxu0 %v368
        %v733 = vpop.f32.mrb[0].mxu0
        %v734 = vadd.f32 0.0, %v733
        %v735 = vpop.f32.mrb[0].mxu0
        %v736 = vadd.f32 0.0, %v735
        %737 = vmatprep.mubr.f32.mxu0 0.0
        %738 = vmatmul.mubr.f32.gmra.mrb[0].mxu0 %v371
        %v739 = vpop.f32.mrb[0].mxu0
        %v740 = vadd.f32 0.0, %v739
        %v741 = vpop.f32.mrb[0].mxu0
        %v742 = vadd.f32 0.0, %v741
        %743 = vmatprep.mubr.f32.mxu0 0.0
        %744 = vmatmul.mubr.f32.gmra.mrb[0].mxu0 %v374
        %v745 = vpop.f32.mrb[0].mxu0
        %v746 = vadd.f32 0.0, %v745
        %v747 = vpop.f32.mrb[0].mxu0
        %v748 = vadd.f32 0.0, %v747
        %749 = vmatprep.mubr.f32.mxu0 0.0
        %750 = vmatmul.mubr.f32.gmra.mrb[0].mxu0 %v377
        %v751 = vpop.f32.mrb[0].mxu0
        %v752 = vadd.f32 0.0, %v751
        %v753 = vpop.f32.mrb[0].mxu0
        %v754 = vadd.f32 0.0, %v753
        %755 = vmatprep.mubr.f32.mxu0 0.0
        %756 = vmatmul.mubr.f32.gmra.mrb[0].mxu0 %v380
        %v757 = vpop.f32.mrb[0].mxu0
        %v758 = vadd.f32 0.0, %v757
        %v759 = vpop.f32.mrb[0].mxu0
        %v760 = vadd.f32 0.0, %v759
        %761 = vmatprep.mubr.f32.mxu0 0.0
        %762 = vmatmul.mubr.f32.gmra.mrb[0].mxu0 %v383
        %v763 = vpop.f32.mrb[0].mxu0
        %v764 = vadd.f32 0.0, %v763
        %v765 = vpop.f32.mrb[0].mxu0
        %v766 = vadd.f32 0.0, %v765
        %767 = vmatprep.mubr.f32.mxu0 0.0
        %768 = vmatmul.mubr.f32.gmra.mrb[0].mxu0 %v386
        %v769 = vpop.f32.mrb[0].mxu0
        %v770 = vadd.f32 0.0, %v769
        %v771 = vpop.f32.mrb[0].mxu0
        %v772 = vadd.f32 0.0, %v771
        %773 = vmatprep.mubr.f32.mxu0 0.0
        %774 = vmatmul.mubr.f32.gmra.mrb[0].mxu0 %v389
        %v775 = vpop.f32.mrb[0].mxu0
        %v776 = vadd.f32 0.0, %v775
        %v777 = vpop.f32.mrb[0].mxu0
        %v778 = vadd.f32 0.0, %v777
        %779 = vmatprep.mubr.f32.mxu0 0.0
        %780 = vmatmul.mubr.f32.gmra.mrb[0].mxu0 %v392
        %v781 = vpop.f32.mrb[0].mxu0
        %v782 = vadd.f32 0.0, %v781
        %v783 = vpop.f32.mrb[0].mxu0
        %v784 = vadd.f32 0.0, %v783
        %785 = vmatprep.mubr.f32.mxu0 0.0
        %786 = vmatmul.mubr.f32.gmra.mrb[0].mxu0 %v395
        %v787 = vpop.f32.mrb[0].mxu0
        %v788 = vadd.f32 0.0, %v787
        %v789 = vpop.f32.mrb[0].mxu0
        %v790 = vadd.f32 0.0, %v789
        %791 = vmatprep.mubr.f32.mxu0 0.0
        %792 = vmatmul.mubr.f32.gmra.mrb[0].mxu0 %v398
        %v793 = vpop.f32.mrb[0].mxu0
        %v794 = vadd.f32 0.0, %v793
        %v795 = vpop.f32.mrb[0].mxu0
        %v796 = vadd.f32 0.0, %v795
        %797 = vmatprep.mubr.f32.mxu0 0.0
        %798 = vmatmul.mubr.f32.gmra.mrb[0].mxu0 %v401
        %v799 = vpop.f32.mrb[0].mxu0
        %v800 = vadd.f32 0.0, %v799
        %v801 = vpop.f32.mrb[0].mxu0
        %v802 = vadd.f32 0.0, %v801
        %803 = vmatprep.mubr.f32.mxu0 0.0
        %804 = vmatmul.mubr.f32.gmra.mrb[0].mxu0 %v404
        %v805 = vpop.f32.mrb[0].mxu0
        %v806 = vadd.f32 0.0, %v805
        %v807 = vpop.f32.mrb[0].mxu0
        %v808 = vadd.f32 0.0, %v807
        %809 = vmatprep.mubr.f32.mxu0 0.0
        %810 = vmatmul.mubr.f32.gmra.mrb[0].mxu0 %v407
        %v811 = vpop.f32.mrb[0].mxu0
        %v812 = vadd.f32 0.0, %v811
        %v813 = vpop.f32.mrb[0].mxu0
        %v814 = vadd.f32 0.0, %v813
        %815 = vmatprep.mubr.f32.mxu0 0.0
        %816 = vmatmul.mubr.f32.gmra.mrb[0].mxu0 %v410
        %v817 = vpop.f32.mrb[0].mxu0
        %v818 = vadd.f32 0.0, %v817
        %v819 = vpop.f32.mrb[0].mxu0
        %v820 = vadd.f32 0.0, %v819
        %821 = vmatprep.mubr.f32.mxu0 0.0
        %822 = vmatmul.mubr.f32.gmra.mrb[0].mxu0 %v413
        %v823 = vpop.f32.mrb[0].mxu0
        %v824 = vadd.f32 0.0, %v823
        %v825 = vpop.f32.mrb[0].mxu0
        %v826 = vadd.f32 0.0, %v825
        %827 = vmatprep.mubr.f32.mxu0 0.0
        %828 = vmatmul.mubr.f32.gmra.mrb[0].mxu0 %v416
        %v829 = vpop.f32.mrb[0].mxu0
        %v830 = vadd.f32 0.0, %v829
        %v831 = vpop.f32.mrb[0].mxu0
        %v832 = vadd.f32 0.0, %v831
        %833 = vmatprep.mubr.f32.mxu0 0.0
        %834 = vmatmul.mubr.f32.gmra.mrb[0].mxu0 %v419
        %v835 = vpop.f32.mrb[0].mxu0
        %v836 = vadd.f32 0.0, %v835
        %v837 = vpop.f32.mrb[0].mxu0
        %v838 = vadd.f32 0.0, %v837
        %839 = vmatprep.mubr.f32.mxu0 0.0
        %840 = vmatmul.mubr.f32.gmra.mrb[0].mxu0 %v422
        %v841 = vpop.f32.mrb[0].mxu0
        %v842 = vadd.f32 0.0, %v841
        %v843 = vpop.f32.mrb[0].mxu0
        %v844 = vadd.f32 0.0, %v843
        %845 = vmatprep.mubr.f32.mxu0 0.0
        %846 = vmatmul.mubr.f32.gmra.mrb[0].mxu0 %v425
        %v847 = vpop.f32.mrb[0].mxu0
        %v848 = vadd.f32 0.0, %v847
        %v849 = vpop.f32.mrb[0].mxu0
        %v850 = vadd.f32 0.0, %v849
        %851 = vmatprep.mubr.f32.mxu0 0.0
        %852 = vmatmul.mubr.f32.gmra.mrb[0].mxu0 %v428
        %v853 = vpop.f32.mrb[0].mxu0
        %v854 = vadd.f32 0.0, %v853
        %v855 = vpop.f32.mrb[0].mxu0
        %v856 = vadd.f32 0.0, %v855
        %857 = vmatprep.mubr.f32.mxu0 0.0
        %858 = vmatmul.mubr.f32.gmra.mrb[0].mxu0 %v431
        %v859 = vpop.f32.mrb[0].mxu0
        %v860 = vadd.f32 0.0, %v859
        %v861 = vpop.f32.mrb[0].mxu0
        %v862 = vadd.f32 0.0, %v861
        %863 = vmatprep.mubr.f32.mxu0 0.0
        %864 = vmatmul.mubr.f32.gmra.mrb[0].mxu0 %v434
        %v865 = vpop.f32.mrb[0].mxu0
        %v866 = vadd.f32 0.0, %v865
        %v867 = vpop.f32.mrb[0].mxu0
        %v868 = vadd.f32 0.0, %v867
        %869 = vmatprep.mubr.f32.mxu0 0.0
        %870 = vmatmul.mubr.f32.gmra.mrb[0].mxu0 %v437
        %v871 = vpop.f32.mrb[0].mxu0
        %v872 = vadd.f32 0.0, %v871
        %v873 = vpop.f32.mrb[0].mxu0
        %v874 = vadd.f32 0.0, %v873
        %875 = vmatprep.mubr.f32.mxu0 0.0
        %876 = vmatmul.mubr.f32.gmra.mrb[0].mxu0 %v440
        %v877 = vpop.f32.mrb[0].mxu0
        %v878 = vadd.f32 0.0, %v877
        %v879 = vpop.f32.mrb[0].mxu0
        %v880 = vadd.f32 0.0, %v879
        %881 = vmatprep.mubr.f32.mxu0 0.0
        %882 = vmatmul.mubr.f32.gmra.mrb[0].mxu0 %v443
        %v883 = vpop.f32.mrb[0].mxu0
        %v884 = vadd.f32 0.0, %v883
        %v885 = vpop.f32.mrb[0].mxu0
        %v886 = vadd.f32 0.0, %v885
        %887 = vmatprep.mubr.f32.mxu0 0.0
        %888 = vmatmul.mubr.f32.gmra.mrb[0].mxu0 %v446
        %v889 = vpop.f32.mrb[0].mxu0
        %v890 = vadd.f32 0.0, %v889
        %v891 = vpop.f32.mrb[0].mxu0
        %v892 = vadd.f32 0.0, %v891
        %893 = vmatprep.mubr.f32.mxu0 0.0
        %894 = vmatmul.mubr.f32.gmra.mrb[0].mxu0 %v449
        %v895 = vpop.f32.mrb[0].mxu0
        %v896 = vadd.f32 0.0, %v895
        %v897 = vpop.f32.mrb[0].mxu0
        %v898 = vadd.f32 0.0, %v897
        %899 = vdwg.mxu0
        %v900 = vpack.c.bf16 %v524, %v518
        %v901 = vpack.c.bf16 %v536, %v530
        %v902 = vpack.c.bf16 %v548, %v542
        %v903 = vpack.c.bf16 %v560, %v554
        %v904 = vpack.c.bf16 %v572, %v566
        %v905 = vpack.c.bf16 %v584, %v578
        %v906 = vpack.c.bf16 %v596, %v590
        %v907 = vpack.c.bf16 %v608, %v602
        %v908 = vpack.c.bf16 %v620, %v614
        %v909 = vpack.c.bf16 %v632, %v626
        %v910 = vpack.c.bf16 %v644, %v638
        %v911 = vpack.c.bf16 %v656, %v650
        %v912 = vpack.c.bf16 %v668, %v662
        %v913 = vpack.c.bf16 %v680, %v674
        %v914 = vpack.c.bf16 %v692, %v686
        %v915 = vpack.c.bf16 %v704, %v698
        %v916 = vpack.c.bf16 %v716, %v710
        %v917 = vpack.c.bf16 %v728, %v722
        %v918 = vpack.c.bf16 %v740, %v734
        %v919 = vpack.c.bf16 %v752, %v746
        %v920 = vpack.c.bf16 %v764, %v758
        %v921 = vpack.c.bf16 %v776, %v770
        %v922 = vpack.c.bf16 %v788, %v782
        %v923 = vpack.c.bf16 %v800, %v794
        %v924 = vpack.c.bf16 %v812, %v806
        %v925 = vpack.c.bf16 %v824, %v818
        %v926 = vpack.c.bf16 %v836, %v830
        %v927 = vpack.c.bf16 %v848, %v842
        %v928 = vpack.c.bf16 %v860, %v854
        %v929 = vpack.c.bf16 %v872, %v866
        %v930 = vpack.c.bf16 %v884, %v878
        %v931 = vpack.c.bf16 %v896, %v890
        %v964 = vunpack.c.l.b16 %v900
        %v965 = vunpack.c.h.b16 %v900
        %v966 = vunpack.c.l.b16 %v901
        %v967 = vunpack.c.h.b16 %v901
        %v968 = vunpack.c.l.b16 %v902
        %v969 = vunpack.c.h.b16 %v902
        %v970 = vunpack.c.l.b16 %v903
        %v971 = vunpack.c.h.b16 %v903
        %v972 = vunpack.c.l.b16 %v904
        %v973 = vunpack.c.h.b16 %v904
        %v974 = vunpack.c.l.b16 %v905
        %v975 = vunpack.c.h.b16 %v905
        %v976 = vunpack.c.l.b16 %v906
        %v977 = vunpack.c.h.b16 %v906
        %v978 = vunpack.c.l.b16 %v907
        %v979 = vunpack.c.h.b16 %v907
        %v980 = vunpack.c.l.b16 %v908
        %v981 = vunpack.c.h.b16 %v908
        %v982 = vunpack.c.l.b16 %v909
        %v983 = vunpack.c.h.b16 %v909
        %v984 = vunpack.c.l.b16 %v910
        %v985 = vunpack.c.h.b16 %v910
        %v986 = vunpack.c.l.b16 %v911
        %v987 = vunpack.c.h.b16 %v911
        %v988 = vunpack.c.l.b16 %v912
        %v989 = vunpack.c.h.b16 %v912
        %v990 = vunpack.c.l.b16 %v913
        %v991 = vunpack.c.h.b16 %v913
        %v992 = vunpack.c.l.b16 %v914
        %v993 = vunpack.c.h.b16 %v914
        %v994 = vunpack.c.l.b16 %v915
        %v995 = vunpack.c.h.b16 %v915
        %v996 = vunpack.c.l.b16 %v916
        %v997 = vunpack.c.h.b16 %v916
        %v998 = vunpack.c.l.b16 %v917
        %v999 = vunpack.c.h.b16 %v917
        %v1000 = vunpack.c.l.b16 %v918
        %v1001 = vunpack.c.h.b16 %v918
        %v1002 = vunpack.c.l.b16 %v919
        %v1003 = vunpack.c.h.b16 %v919
        %v1004 = vunpack.c.l.b16 %v920
        %v1005 = vunpack.c.h.b16 %v920
        %v1006 = vunpack.c.l.b16 %v921
        %v1007 = vunpack.c.h.b16 %v921
        %v1008 = vunpack.c.l.b16 %v922
        %v1009 = vunpack.c.h.b16 %v922
        %v1010 = vunpack.c.l.b16 %v923
        %v1011 = vunpack.c.h.b16 %v923
        %v1012 = vunpack.c.l.b16 %v924
        %v1013 = vunpack.c.h.b16 %v924
        %v1014 = vunpack.c.l.b16 %v925
        %v1015 = vunpack.c.h.b16 %v925
        %v1016 = vunpack.c.l.b16 %v926
        %v1017 = vunpack.c.h.b16 %v926
        %v1018 = vunpack.c.l.b16 %v927
        %v1019 = vunpack.c.h.b16 %v927
        %v1020 = vunpack.c.l.b16 %v928
        %v1021 = vunpack.c.h.b16 %v928
        %v1022 = vunpack.c.l.b16 %v929
        %v1023 = vunpack.c.h.b16 %v929
        %v1024 = vunpack.c.l.b16 %v930
        %v1025 = vunpack.c.h.b16 %v930
        %v1026 = vunpack.c.l.b16 %v931
        %v1027 = vunpack.c.h.b16 %v931
        %v1028 = vpack.c.b16 %v964, %v964
        %v1029 = vpack.c.b16 %v965, %v965
        %v1030 = vpack.c.b16 %v966, %v966
        %v1031 = vpack.c.b16 %v967, %v967
        %v1032 = vpack.c.b16 %v968, %v968
        %v1033 = vpack.c.b16 %v969, %v969
        %v1034 = vpack.c.b16 %v970, %v970
        %v1035 = vpack.c.b16 %v971, %v971
        %v1036 = vpack.c.b16 %v972, %v972
        %v1037 = vpack.c.b16 %v973, %v973
        %v1038 = vpack.c.b16 %v974, %v974
        %v1039 = vpack.c.b16 %v975, %v975
        %v1040 = vpack.c.b16 %v976, %v976
        %v1041 = vpack.c.b16 %v977, %v977
        %v1042 = vpack.c.b16 %v978, %v978
        %v1043 = vpack.c.b16 %v979, %v979
        %v1044 = vpack.c.b16 %v980, %v980
        %v1045 = vpack.c.b16 %v981, %v981
        %v1046 = vpack.c.b16 %v982, %v982
        %v1047 = vpack.c.b16 %v983, %v983
        %v1048 = vpack.c.b16 %v984, %v984
        %v1049 = vpack.c.b16 %v985, %v985
        %v1050 = vpack.c.b16 %v986, %v986
        %v1051 = vpack.c.b16 %v987, %v987
        %v1052 = vpack.c.b16 %v988, %v988
        %v1053 = vpack.c.b16 %v989, %v989
        %v1054 = vpack.c.b16 %v990, %v990
        %v1055 = vpack.c.b16 %v991, %v991
        %v1056 = vpack.c.b16 %v992, %v992
        %v1057 = vpack.c.b16 %v993, %v993
        %v1058 = vpack.c.b16 %v994, %v994
        %v1059 = vpack.c.b16 %v995, %v995
        %v1060 = vpack.c.b16 %v996, %v996
        %v1061 = vpack.c.b16 %v997, %v997
        %v1062 = vpack.c.b16 %v998, %v998
        %v1063 = vpack.c.b16 %v999, %v999
        %v1064 = vpack.c.b16 %v1000, %v1000
        %v1065 = vpack.c.b16 %v1001, %v1001
        %v1066 = vpack.c.b16 %v1002, %v1002
        %v1067 = vpack.c.b16 %v1003, %v1003
        %v1068 = vpack.c.b16 %v1004, %v1004
        %v1069 = vpack.c.b16 %v1005, %v1005
        %v1070 = vpack.c.b16 %v1006, %v1006
        %v1071 = vpack.c.b16 %v1007, %v1007
        %v1072 = vpack.c.b16 %v1008, %v1008
        %v1073 = vpack.c.b16 %v1009, %v1009
        %v1074 = vpack.c.b16 %v1010, %v1010
        %v1075 = vpack.c.b16 %v1011, %v1011
        %v1076 = vpack.c.b16 %v1012, %v1012
        %v1077 = vpack.c.b16 %v1013, %v1013
        %v1078 = vpack.c.b16 %v1014, %v1014
        %v1079 = vpack.c.b16 %v1015, %v1015
        %v1080 = vpack.c.b16 %v1016, %v1016
        %v1081 = vpack.c.b16 %v1017, %v1017
        %v1082 = vpack.c.b16 %v1018, %v1018
        %v1083 = vpack.c.b16 %v1019, %v1019
        %v1084 = vpack.c.b16 %v1020, %v1020
        %v1085 = vpack.c.b16 %v1021, %v1021
        %v1086 = vpack.c.b16 %v1022, %v1022
        %v1087 = vpack.c.b16 %v1023, %v1023
        %v1088 = vpack.c.b16 %v1024, %v1024
        %v1089 = vpack.c.b16 %v1025, %v1025
        %v1090 = vpack.c.b16 %v1026, %v1026
        %v1091 = vpack.c.b16 %v1027, %v1027
        %1156 = vst [vmem:[%s165] sm:$0xf] %v1028
        %1157 = vst [vmem:[%s165 + $0x4] sm:$0xf] %v1029
        %1158 = vst [vmem:[%s165 + $0x8] sm:$0xf] %v1030
        %1159 = vst [vmem:[%s165 + $0xc] sm:$0xf] %v1031
        %1160 = vst [vmem:[%s165 + $0x10] sm:$0xf] %v1032
        %1161 = vst [vmem:[%s165 + $0x14] sm:$0xf] %v1033
        %1162 = vst [vmem:[%s165 + $0x18] sm:$0xf] %v1034
        %1163 = vst [vmem:[%s165 + $0x1c] sm:$0xf] %v1035
        %1164 = vst [vmem:[%s165 + $0x20] sm:$0xf] %v1036
        %1165 = vst [vmem:[%s165 + $0x24] sm:$0xf] %v1037
        %1166 = vst [vmem:[%s165 + $0x28] sm:$0xf] %v1038
        %1167 = vst [vmem:[%s165 + $0x2c] sm:$0xf] %v1039
        %1168 = vst [vmem:[%s165 + $0x30] sm:$0xf] %v1040
        %1169 = vst [vmem:[%s165 + $0x34] sm:$0xf] %v1041
        %1170 = vst [vmem:[%s165 + $0x38] sm:$0xf] %v1042
        %1171 = vst [vmem:[%s165 + $0x3c] sm:$0xf] %v1043
        %1172 = vst [vmem:[%s165 + $0x40] sm:$0xf] %v1044
        %1173 = vst [vmem:[%s165 + $0x44] sm:$0xf] %v1045
        %1174 = vst [vmem:[%s165 + $0x48] sm:$0xf] %v1046
        %1175 = vst [vmem:[%s165 + $0x4c] sm:$0xf] %v1047
        %1176 = vst [vmem:[%s165 + $0x50] sm:$0xf] %v1048
        %1177 = vst [vmem:[%s165 + $0x54] sm:$0xf] %v1049
        %1178 = vst [vmem:[%s165 + $0x58] sm:$0xf] %v1050
        %1179 = vst [vmem:[%s165 + $0x5c] sm:$0xf] %v1051
        %1180 = vst [vmem:[%s165 + $0x60] sm:$0xf] %v1052
        %1181 = vst [vmem:[%s165 + $0x64] sm:$0xf] %v1053
        %1182 = vst [vmem:[%s165 + $0x68] sm:$0xf] %v1054
        %1183 = vst [vmem:[%s165 + $0x6c] sm:$0xf] %v1055
        %1184 = vst [vmem:[%s165 + $0x70] sm:$0xf] %v1056
        %1185 = vst [vmem:[%s165 + $0x74] sm:$0xf] %v1057
        %1186 = vst [vmem:[%s165 + $0x78] sm:$0xf] %v1058
        %1187 = vst [vmem:[%s165 + $0x7c] sm:$0xf] %v1059
        %1188 = vst [vmem:[%s165 + $0x80] sm:$0xf] %v1060
        %1189 = vst [vmem:[%s165 + $0x84] sm:$0xf] %v1061
        %1190 = vst [vmem:[%s165 + $0x88] sm:$0xf] %v1062
        %1191 = vst [vmem:[%s165 + $0x8c] sm:$0xf] %v1063
        %1192 = vst [vmem:[%s165 + $0x90] sm:$0xf] %v1064
        %1193 = vst [vmem:[%s165 + $0x94] sm:$0xf] %v1065
        %1194 = vst [vmem:[%s165 + $0x98] sm:$0xf] %v1066
        %1195 = vst [vmem:[%s165 + $0x9c] sm:$0xf] %v1067
        %1196 = vst [vmem:[%s165 + $0xa0] sm:$0xf] %v1068
        %1197 = vst [vmem:[%s165 + $0xa4] sm:$0xf] %v1069
        %1198 = vst [vmem:[%s165 + $0xa8] sm:$0xf] %v1070
        %1199 = vst [vmem:[%s165 + $0xac] sm:$0xf] %v1071
        %1200 = vst [vmem:[%s165 + $0xb0] sm:$0xf] %v1072
        %1201 = vst [vmem:[%s165 + $0xb4] sm:$0xf] %v1073
        %1202 = vst [vmem:[%s165 + $0xb8] sm:$0xf] %v1074
        %1203 = vst [vmem:[%s165 + $0xbc] sm:$0xf] %v1075
        %1204 = vst [vmem:[%s165 + $0xc0] sm:$0xf] %v1076
        %1205 = vst [vmem:[%s165 + $0xc4] sm:$0xf] %v1077
        %1206 = vst [vmem:[%s165 + $0xc8] sm:$0xf] %v1078
        %1207 = vst [vmem:[%s165 + $0xcc] sm:$0xf] %v1079
        %1208 = vst [vmem:[%s165 + $0xd0] sm:$0xf] %v1080
        %1209 = vst [vmem:[%s165 + $0xd4] sm:$0xf] %v1081
        %1210 = vst [vmem:[%s165 + $0xd8] sm:$0xf] %v1082
        %1211 = vst [vmem:[%s165 + $0xdc] sm:$0xf] %v1083
        %1212 = vst [vmem:[%s165 + $0xe0] sm:$0xf] %v1084
        %1213 = vst [vmem:[%s165 + $0xe4] sm:$0xf] %v1085
        %1214 = vst [vmem:[%s165 + $0xe8] sm:$0xf] %v1086
        %1215 = vst [vmem:[%s165 + $0xec] sm:$0xf] %v1087
        %1216 = vst [vmem:[%s165 + $0xf0] sm:$0xf] %v1088
        %1217 = vst [vmem:[%s165 + $0xf4] sm:$0xf] %v1089
        %1218 = vst [vmem:[%s165 + $0xf8] sm:$0xf] %v1090
        %1219 = vst [vmem:[%s165 + $0xfc] sm:$0xf] %v1091
        %vm1220 = vcmask 64512
        %1221 = vst.msk [vmem:[%s184] sm:$0xff] %vm1220, %v520
        %1222 = vst.msk [vmem:[%s184 + $0x8] sm:$0xff] %vm1220, %v526
        %1223 = vst.msk [vmem:[%s184 + $0x10] sm:$0xff] %vm1220, %v532
        %1224 = vst.msk [vmem:[%s184 + $0x18] sm:$0xff] %vm1220, %v538
        %1225 = vst.msk [vmem:[%s184 + $0x20] sm:$0xff] %vm1220, %v544
        %1226 = vst.msk [vmem:[%s184 + $0x28] sm:$0xff] %vm1220, %v550
        %1227 = vst.msk [vmem:[%s184 + $0x30] sm:$0xff] %vm1220, %v556
        %1228 = vst.msk [vmem:[%s184 + $0x38] sm:$0xff] %vm1220, %v562
        %1229 = vst.msk [vmem:[%s184 + $0x40] sm:$0xff] %vm1220, %v568
        %1230 = vst.msk [vmem:[%s184 + $0x48] sm:$0xff] %vm1220, %v574
        %1231 = vst.msk [vmem:[%s184 + $0x50] sm:$0xff] %vm1220, %v580
        %1232 = vst.msk [vmem:[%s184 + $0x58] sm:$0xff] %vm1220, %v586
        %1233 = vst.msk [vmem:[%s184 + $0x60] sm:$0xff] %vm1220, %v592
        %1234 = vst.msk [vmem:[%s184 + $0x68] sm:$0xff] %vm1220, %v598
        %1235 = vst.msk [vmem:[%s184 + $0x70] sm:$0xff] %vm1220, %v604
        %1236 = vst.msk [vmem:[%s184 + $0x78] sm:$0xff] %vm1220, %v610
        %1237 = vst.msk [vmem:[%s184 + $0x80] sm:$0xff] %vm1220, %v616
        %1238 = vst.msk [vmem:[%s184 + $0x88] sm:$0xff] %vm1220, %v622
        %1239 = vst.msk [vmem:[%s184 + $0x90] sm:$0xff] %vm1220, %v628
        %1240 = vst.msk [vmem:[%s184 + $0x98] sm:$0xff] %vm1220, %v634
        %1241 = vst.msk [vmem:[%s184 + $0xa0] sm:$0xff] %vm1220, %v640
        %1242 = vst.msk [vmem:[%s184 + $0xa8] sm:$0xff] %vm1220, %v646
        %1243 = vst.msk [vmem:[%s184 + $0xb0] sm:$0xff] %vm1220, %v652
        %1244 = vst.msk [vmem:[%s184 + $0xb8] sm:$0xff] %vm1220, %v658
        %1245 = vst.msk [vmem:[%s184 + $0xc0] sm:$0xff] %vm1220, %v664
        %1246 = vst.msk [vmem:[%s184 + $0xc8] sm:$0xff] %vm1220, %v670
        %1247 = vst.msk [vmem:[%s184 + $0xd0] sm:$0xff] %vm1220, %v676
        %1248 = vst.msk [vmem:[%s184 + $0xd8] sm:$0xff] %vm1220, %v682
        %1249 = vst.msk [vmem:[%s184 + $0xe0] sm:$0xff] %vm1220, %v688
        %1250 = vst.msk [vmem:[%s184 + $0xe8] sm:$0xff] %vm1220, %v694
        %1251 = vst.msk [vmem:[%s184 + $0xf0] sm:$0xff] %vm1220, %v700
        %1252 = vst.msk [vmem:[%s184 + $0xf8] sm:$0xff] %vm1220, %v706
        %1253 = vst.msk [vmem:[%s184 + $0x100] sm:$0xff] %vm1220, %v712
        %1254 = vst.msk [vmem:[%s184 + $0x108] sm:$0xff] %vm1220, %v718
        %1255 = vst.msk [vmem:[%s184 + $0x110] sm:$0xff] %vm1220, %v724
        %1256 = vst.msk [vmem:[%s184 + $0x118] sm:$0xff] %vm1220, %v730
        %1257 = vst.msk [vmem:[%s184 + $0x120] sm:$0xff] %vm1220, %v736
        %1258 = vst.msk [vmem:[%s184 + $0x128] sm:$0xff] %vm1220, %v742
        %1259 = vst.msk [vmem:[%s184 + $0x130] sm:$0xff] %vm1220, %v748
        %1260 = vst.msk [vmem:[%s184 + $0x138] sm:$0xff] %vm1220, %v754
        %1261 = vst.msk [vmem:[%s184 + $0x140] sm:$0xff] %vm1220, %v760
        %1262 = vst.msk [vmem:[%s184 + $0x148] sm:$0xff] %vm1220, %v766
        %1263 = vst.msk [vmem:[%s184 + $0x150] sm:$0xff] %vm1220, %v772
        %1264 = vst.msk [vmem:[%s184 + $0x158] sm:$0xff] %vm1220, %v778
        %1265 = vst.msk [vmem:[%s184 + $0x160] sm:$0xff] %vm1220, %v784
        %1266 = vst.msk [vmem:[%s184 + $0x168] sm:$0xff] %vm1220, %v790
        %1267 = vst.msk [vmem:[%s184 + $0x170] sm:$0xff] %vm1220, %v796
        %1268 = vst.msk [vmem:[%s184 + $0x178] sm:$0xff] %vm1220, %v802
        %1269 = vst.msk [vmem:[%s184 + $0x180] sm:$0xff] %vm1220, %v808
        %1270 = vst.msk [vmem:[%s184 + $0x188] sm:$0xff] %vm1220, %v814
        %1271 = vst.msk [vmem:[%s184 + $0x190] sm:$0xff] %vm1220, %v820
        %1272 = vst.msk [vmem:[%s184 + $0x198] sm:$0xff] %vm1220, %v826
        %1273 = vst.msk [vmem:[%s184 + $0x1a0] sm:$0xff] %vm1220, %v832
        %1274 = vst.msk [vmem:[%s184 + $0x1a8] sm:$0xff] %vm1220, %v838
        %1275 = vst.msk [vmem:[%s184 + $0x1b0] sm:$0xff] %vm1220, %v844
        %1276 = vst.msk [vmem:[%s184 + $0x1b8] sm:$0xff] %vm1220, %v850
        %1277 = vst.msk [vmem:[%s184 + $0x1c0] sm:$0xff] %vm1220, %v856
        %1278 = vst.msk [vmem:[%s184 + $0x1c8] sm:$0xff] %vm1220, %v862
        %1279 = vst.msk [vmem:[%s184 + $0x1d0] sm:$0xff] %vm1220, %v868
        %1280 = vst.msk [vmem:[%s184 + $0x1d8] sm:$0xff] %vm1220, %v874
        %1281 = vst.msk [vmem:[%s184 + $0x1e0] sm:$0xff] %vm1220, %v880
        %1282 = vst.msk [vmem:[%s184 + $0x1e8] sm:$0xff] %vm1220, %v886
        %1283 = vst.msk [vmem:[%s184 + $0x1f0] sm:$0xff] %vm1220, %v892
        %1284 = vst.msk [vmem:[%s184 + $0x1f8] sm:$0xff] %vm1220, %v898
        %s1285 = sand.u32 %s73, 1
        %s1286 = scalar_lea.sflag [#allocation3], %s1285
        %s1287 = sand.u32 %s73, 1
        %s1288 = smul.addr %s1287, 256
        %s1289 = scalar_lea.vmem [#allocation2], %s1288
        %s1290 = smul.u32 64, %s18
        %p1291 = scmp.lt.s32.totalorder %s1290, 255
        %s1292 = scalar_select %p1291, %s1290, 255
        %s1293 = smul.addr %s1292, 8
        %s1294 = scalar_lea.vmem %s3, %s1293
        // Predicated region
        $region29: #{tpu_custom_call.1} parent=27 // pred_check
          %p1295 = pneg %p83
        $region30: #{tpu_custom_call.1} parent=27 // pred_check_branch
          %1297 = sbr.rel (%p1295) target = $region32
        $region31: #{tpu_custom_call.1} parent=27 // pred_region
          %s1298 = smul.u32 64, %s18
          %s1300 = ssub.s32 4096, 4096
          %1301 = vsyncadd %s1286, %s1300
          %s1302 = smul.addr %s1298, 64
          %s1303 = scalar_lea.hbm %s2, %s1302
          %s1304 = sshll.u32 %s1289, 4
          %s1305 = int_to_ptr.vmem [resolvable:$true] %s1304
          %1310 = dma.vmem_to_hbm [thread:$0]  %s1305, 4096, %s1303, %s1286, 64, 64, 4
        $region32: #{tpu_custom_call.1} parent=27 // pred_fallthru
          _
        // Predicated region
        $region33: #{tpu_custom_call.1} parent=27 // pred_check
          %p1311 = pneg %p109
        $region34: #{tpu_custom_call.1} parent=27 // pred_check_branch
          %1313 = sbr.rel (%p1311) target = $region36
        $region35: #{tpu_custom_call.1} parent=27 // pred_region
          %s1314 = smul.u32 64, %s18
        $region36: #{tpu_custom_call.1} parent=27 // pred_fallthru
          _
      $region28: #{tpu_custom_call.1} parent=5 // pred_fallthru
        _
      %p1315 = scmp.le.s32.totalorder 2, %s13
      // Predicated region
      $region37: #{tpu_custom_call.1} parent=5 // pred_check
        %p1316 = pneg %p1315
      $region38: #{tpu_custom_call.1} parent=5 // pred_check_branch
        %1318 = sbr.rel (%p1316) target = $region40
      $region39: #{tpu_custom_call.1} parent=5 // pred_region
        %s1319 = ssub.s32 %s13, 2
        // Predicated region
        $region41: #{tpu_custom_call.1} parent=39 // pred_check
          %p1320 = pneg %p89
        $region42: #{tpu_custom_call.1} parent=39 // pred_check_branch
          %1322 = sbr.rel (%p1320) target = $region44
        $region43: #{tpu_custom_call.1} parent=39 // pred_region
          %s1323 = sand.u32 %s74, 1
          %s1324 = scalar_lea.sflag [#allocation3], %s1323
          %s1325 = sand.u32 %s74, 1
          %s1326 = smul.addr %s1325, 256
          %s1327 = scalar_lea.vmem [#allocation2], %s1326
          %1328 = dma.done %s1324, 4096
        $region44: #{tpu_custom_call.1} parent=39 // pred_fallthru
          _
        // Predicated region
        $region45: #{tpu_custom_call.1} parent=39 // pred_check
          %p1329 = pneg %p115
        $region46: #{tpu_custom_call.1} parent=39 // pred_check_branch
          %1331 = sbr.rel (%p1329) target = $region48
        $region47: #{tpu_custom_call.1} parent=39 // pred_region
          %s1332 = smul.u32 64, %s19
          %p1333 = scmp.lt.s32.totalorder %s1332, 255
          %s1334 = scalar_select %p1333, %s1332, 255
          %s1335 = smul.addr %s1334, 8
          %s1336 = scalar_lea.vmem %s3, %s1335
        $region48: #{tpu_custom_call.1} parent=39 // pred_fallthru
          _
      $region40: #{tpu_custom_call.1} parent=5 // pred_fallthru
        _
    $region6: #{tpu_custom_call.1} parent=1 // loop_footer
      %s17 = sadd.s32 1, %s13
    $region7: #{tpu_custom_call.1} parent=1 // loop_footer_branch
      %12 = sbr.rel target = $region3
    $region8: #{tpu_custom_call.1} parent=1 // loop_exit
      _
    %1337 = vsyncpa [#allocation3], 1
    %s1338 = scalar_lea.sflag [#allocation3], 1
    %1339 = vsyncpa %s1338, 1

</llo_original>
